<compile_context>
chip_gen: v7x
topology: tpu7x:2x2x1
jax: 0.10.0
libtpu: 0.0.40
codegen_flags: <defaults>
</compile_context>

<pallas_src>
import functools

import jax
import jax.numpy as jnp
from jax.experimental import pallas as pl
from jax.experimental.pallas import tpu as pltpu


# ---------------------------------------------------------------------------
# Backbone (stand-in for the frozen, pretrained ResNet-50 feature extractor)
# TODO(synk): the full pretrained ResNet-50 (stem + 4 residual stages + BN) is
# not reproduced (no checkpoint available); a deterministic 3x3 conv + ReLU +
# global-average-pool stand-in produces the (B, feat) vector that `self.res(x)`
# followed by `x.view(B, -1)` would produce.
# ---------------------------------------------------------------------------
def _backbone_kernel(p_ref, w_ref, b_ref, o_ref, acc_ref, *, inv_hw):
    # p_ref: (BB, RC, 9C) bf16 im2col patches    w_ref: (9C, TC) bf16
    # b_ref: (1, TC) f32                         o_ref: (BB, TC) f32
    # acc_ref: (BB, TC) f32 scratch (pool-sum accumulator across the r axis)
    r = pl.program_id(2)

    @pl.when(r == 0)
    def _():
        acc_ref[...] = jnp.zeros_like(acc_ref)

    p = p_ref[...]
    BB, RC, K9 = p.shape
    # Single fused-tap matmul: 9 conv taps folded into K = 9*C.
    h = jnp.dot(p.reshape(BB * RC, K9), w_ref[...],
                preferred_element_type=jnp.float32)
    h = jnp.maximum(h + b_ref[...], 0.0)                 # bias + ReLU
    acc_ref[...] += jnp.sum(h.reshape(BB, RC, -1), axis=1)   # partial pool sum

    @pl.when(r == pl.num_programs(2) - 1)
    def _():
        # AdaptiveAvgPool2d((1,1)) -> flatten; emit f32 (lane-dense writeback).
        o_ref[...] = (acc_ref[...] * inv_hw).astype(o_ref.dtype)


def _pick_cout_tile(cout):
    for t in (256, 128):          # 256 matches v6e/v7x MXU width
        if cout % t == 0:
            return t
    return cout


def _pick_row_chunk(hw, bb, target_rows=256):
    # ~256 rows per matmul: good MXU fill on v6e/v7x, safe on v5e, small live set.
    per_img = max(8, target_rows // bb)
    if hw <= per_img:
        return hw
    for cand in range(per_img, 7, -1):
        if hw % cand == 0 and cand % 8 == 0:
            return cand
    return hw


def backbone_features(x_nchw, w_conv, b_conv, *, block_b=8):
    """x (B,C,H,W) f32; w_conv (3,3,C,Cout) f32; b_conv (1,Cout) f32 -> (B,Cout) f32."""
    B, C, H, W = x_nchw.shape
    KH, KW, _, Cout = w_conv.shape
    BB = B if B <= block_b else block_b
    assert B % BB == 0, "demo path assumes the batch block divides B"
    HW = H * W
    K9 = KH * KW * C

    # Wrapper-side im2col for the C=3 stem: one layout change + pad + 9 taps
    # concatenated on the channel axis -> (B, H*W, 27) bf16.
    x_pad = jnp.pad(jnp.transpose(x_nchw, (0, 2, 3, 1)),
                    ((0, 0), (1, 1), (1, 1), (0, 0)))
    taps = [x_pad[:, dy:dy + H, dx:dx + W, :]
            for dy in range(KH) for dx in range(KW)]
    patches = jnp.concatenate(taps, axis=-1).reshape(B, HW, K9).astype(jnp.bfloat16)
    w = w_conv.reshape(K9, Cout).astype(jnp.bfloat16)     # tap order matches taps

    TC = _pick_cout_tile(Cout)
    RC = _pick_row_chunk(HW, BB)

    return pl.pallas_call(
        functools.partial(_backbone_kernel, inv_hw=1.0 / float(HW)),
        out_shape=jax.ShapeDtypeStruct((B, Cout), jnp.float32),
        grid=(B // BB, Cout // TC, HW // RC),
        in_specs=[
            pl.BlockSpec((BB, RC, K9), lambda b, j, r: (b, r, 0)),
            pl.BlockSpec((K9, TC), lambda b, j, r: (0, j)),
            pl.BlockSpec((1, TC), lambda b, j, r: (0, j)),
        ],
        out_specs=pl.BlockSpec((BB, TC), lambda b, j, r: (b, j)),
        scratch_shapes=[pltpu.VMEM((BB, TC), jnp.float32)],
        compiler_params=pltpu.CompilerParams(
            # batch / Cout tiles are independent -> both TCs on v7x; the
            # spatial reduction carries the accumulator -> "arbitrary".
            dimension_semantics=("parallel", "parallel", "arbitrary"),
            # Per-step blocks are tiny even at 224x224 / Cout=2048; 32 MiB is
            # safe on all of v5e/v6e/v7x (64 MiB physical on v7x).
            vmem_limit_bytes=32 * 1024 * 1024),
    )(patches, w, b_conv)


# ---------------------------------------------------------------------------
# Fused head: fc1 -> BatchNorm1d -> ReLU -> fc2 -> BatchNorm1d -> ReLU ->
# Dropout(0.75).  One pallas_call: w1 VMEM-resident, fc1/bn1/relu computed once
# at step 0 into a VMEM scratch, fc2 weight columns streamed tile-by-tile.
# BN stats are per-feature, so fc2 column tiles are independent.
# ---------------------------------------------------------------------------
_EPS = 1e-5


def _head_kernel(x_ref, w1_ref, b1_ref, g1_ref, be1_ref,
                 w2_ref, b2_ref, g2_ref, be2_ref, bits_ref,
                 o_ref, h1_ref):
    j = pl.program_id(0)

    @pl.when(j == 0)
    def _():
        x = x_ref[...].astype(jnp.bfloat16)
        h = jnp.dot(x, w1_ref[...], preferred_element_type=jnp.float32) + b1_ref[...]
        mu = jnp.mean(h, axis=0, keepdims=True)
        var = jnp.mean((h - mu) * (h - mu), axis=0, keepdims=True)   # biased var
        h = (h - mu) * jax.lax.rsqrt(var + _EPS) * g1_ref[...] + be1_ref[...]
        h1_ref[...] = jnp.maximum(h, 0.0).astype(h1_ref.dtype)

    h2 = jnp.dot(h1_ref[...], w2_ref[...],
                 preferred_element_type=jnp.float32) + b2_ref[...]
    mu2 = jnp.mean(h2, axis=0, keepdims=True)
    var2 = jnp.mean((h2 - mu2) * (h2 - mu2), axis=0, keepdims=True)  # biased var
    h2 = (h2 - mu2) * jax.lax.rsqrt(var2 + _EPS) * g2_ref[...] + be2_ref[...]
    h2 = jnp.maximum(h2, 0.0)
    # Dropout(p=0.75): keep with prob 0.25 via one integer compare + select.
    keep = bits_ref[...] < jnp.uint32(0x40000000)
    o_ref[...] = jnp.where(keep, h2 * 4.0, 0.0).astype(o_ref.dtype)


def _pick_head_tile(n, preferred=512):
    # Wide tiles (512) amortize per-step overhead; keep >= 2 tiles when possible.
    for t in (preferred, 256, 128):
        if n % t == 0 and n // t >= 2:
            return t
    return n


def head_forward(feat, params, bits):
    B, K1 = feat.shape
    H = params["w1"].shape[1]
    N = params["w2"].shape[1]
    TN = _pick_head_tile(N)
    return pl.pallas_call(
        _head_kernel,
        out_shape=jax.ShapeDtypeStruct((B, N), jnp.float32),
        grid=(N // TN,),
        in_specs=[
            pl.BlockSpec((B, K1), lambda j: (0, 0)),     # features (small, reused)
            pl.BlockSpec((K1, H), lambda j: (0, 0)),     # w1, VMEM-resident
            pl.BlockSpec((1, H), lambda j: (0, 0)),      # b1
            pl.BlockSpec((1, H), lambda j: (0, 0)),      # bn1 gamma
            pl.BlockSpec((1, H), lambda j: (0, 0)),      # bn1 beta
            pl.BlockSpec((H, TN), lambda j: (0, j)),     # w2 column tile (streamed)
            pl.BlockSpec((1, TN), lambda j: (0, j)),     # b2
            pl.BlockSpec((1, TN), lambda j: (0, j)),     # bn2 gamma
            pl.BlockSpec((1, TN), lambda j: (0, j)),     # bn2 beta
            pl.BlockSpec((B, TN), lambda j: (0, j)),     # dropout bits
        ],
        out_specs=pl.BlockSpec((B, TN), lambda j: (0, j)),
        scratch_shapes=[pltpu.VMEM((B, H), jnp.bfloat16)],   # h1, carried across steps
        compiler_params=pltpu.CompilerParams(
            # h1 scratch is written at j==0 and read by later column steps, so
            # this axis must stay sequential; the head is HBM-bound on weight
            # streaming, so losing the v7x 2-TC split here costs ~nothing.
            dimension_semantics=("arbitrary",),
            # Production (2048x2048): w1 resident 8 MiB (+double buffer) + one
            # streamed (2048, 512) bf16 w2 tile x2 ~ 21 MiB; <= 48 MiB keeps
            # headroom inside v7x's 64 MiB physical VMEM.
            vmem_limit_bytes=48 * 1024 * 1024),
    )(feat, params["w1"], params["b1"], params["g1"], params["be1"],
      params["w2"], params["b2"], params["g2"], params["be2"], bits)


def image_cnn_forward(x, w_conv, b_conv, params, dropout_key):
    """imageCNN.forward: res backbone (stand-in) -> flatten -> fc1/bn1/relu ->
    fc2/bn2/relu -> dropout(0.75)."""
    feat = backbone_features(x, w_conv, b_conv)          # x = self.res(x); x.view(B, -1)
    bits = jax.random.bits(dropout_key, (x.shape[0], params["w2"].shape[1]),
                           dtype=jnp.uint32)             # fresh mask per call
    return head_forward(feat, params, bits)


if __name__ == "__main__":
    key = jax.random.PRNGKey(0)
    B, C, Himg, Wimg = 2, 3, 16, 16
    FEAT = 256   # scaled-down stand-in for ResNet-50's 2048-dim feature vector
    HID = 256    # hidden_size (scaled from 2048)
    OUT = 512    # output_size (scaled from 2048; >=2 head column tiles)

    k = jax.random.split(key, 8)
    x = jax.random.normal(k[0], (B, C, Himg, Wimg), jnp.float32)

    # Backbone stand-in parameters: 3x3 SAME conv weight (kh, kw, Cin, Cout) + bias.
    w_conv = jax.random.normal(k[1], (3, 3, C, FEAT), jnp.float32) * 0.05
    b_conv = jax.random.normal(k[2], (1, FEAT), jnp.float32) * 0.05

    # Head parameters. PyTorch Linear stores (out, in); build that way then
    # transpose so kernels compute x @ W^T + b.  MXU operands are bf16 (f32
    # accumulation via preferred_element_type); BN params / biases stay f32.
    w1_oi = jax.random.normal(k[3], (HID, FEAT), jnp.float32) / jnp.sqrt(FEAT)
    b1 = jax.random.normal(k[4], (1, HID), jnp.float32) * 0.01
    w2_oi = jax.random.normal(k[5], (OUT, HID), jnp.float32) / jnp.sqrt(HID)
    b2 = jax.random.normal(k[6], (1, OUT), jnp.float32) * 0.01
    params = dict(
        w1=w1_oi.T.astype(jnp.bfloat16), b1=b1,
        g1=jnp.ones((1, HID), jnp.float32), be1=jnp.zeros((1, HID), jnp.float32),
        w2=w2_oi.T.astype(jnp.bfloat16), b2=b2,
        g2=jnp.ones((1, OUT), jnp.float32), be2=jnp.zeros((1, OUT), jnp.float32),
    )

    out = image_cnn_forward(x, w_conv, b_conv, params, dropout_key=k[7])
    out = jax.block_until_ready(out)
    assert out.shape == (B, OUT) and out.dtype == jnp.float32
    print("KERNEL_OK")
</pallas_src>

<mosaic_0001>
module attributes {stable_mosaic.version = 11 : i64} {
  func.func @_backbone_kernel(%arg0: i32, %arg1: i32, %arg2: i32, %arg3: memref<2x128x27xbf16, #tpu.memory_space<vmem>>, %arg4: memref<27x256xbf16, #tpu.memory_space<vmem>>, %arg5: memref<1x256xf32, #tpu.memory_space<vmem>>, %arg6: memref<2x256xf32, #tpu.memory_space<vmem>>, %arg7: memref<2x256xf32, #tpu.memory_space<vmem>>) attributes {dimension_semantics = [#tpu.dimension_semantics<parallel>, #tpu.dimension_semantics<parallel>, #tpu.dimension_semantics<arbitrary>], iteration_bounds = array<i64: 1, 1, 2>, scalar_prefetch = 0 : i64, scratch_operands = 1 : i64, tpu.core_type = #tpu.core_type<tc>, window_params = [{transform_indices = @transform_0, window_bounds = array<i64: 2, 128, 27>}, {transform_indices = @transform_1, window_bounds = array<i64: 27, 256>}, {transform_indices = @transform_2, window_bounds = array<i64: 1, 256>}, {transform_indices = @transform_3, window_bounds = array<i64: 2, 256>}]} {
    %c0_i32 = arith.constant 0 : i32
    %0 = arith.cmpi eq, %arg2, %c0_i32 : i32
    %1 = arith.extui %0 : i1 to i32
    %c0_i32_0 = arith.constant 0 : i32
    %2 = arith.cmpi ne, %1, %c0_i32_0 : i32
    scf.if %2 {
      %cst_14 = arith.constant 0.000000e+00 : f32
      %20 = vector.broadcast %cst_14 : f32 to vector<2x256xf32>
      %c0_15 = arith.constant 0 : index
      %c0_16 = arith.constant 0 : index
      %21 = vector.load %arg7[%c0_15, %c0_16] : memref<2x256xf32, #tpu.memory_space<vmem>>, vector<2x256xf32>
      tpu.vector_store %arg7[%c0_15, %c0_16], %20 {strides = array<i32>} : memref<2x256xf32, #tpu.memory_space<vmem>>, vector<2x256xf32>,
    } else {
    }
    %c0 = arith.constant 0 : index
    %c0_1 = arith.constant 0 : index
    %c0_2 = arith.constant 0 : index
    %3 = vector.load %arg3[%c0, %c0_1, %c0_2] : memref<2x128x27xbf16, #tpu.memory_space<vmem>>, vector<2x128x27xbf16>
    %4 = vector.shape_cast %3 : vector<2x128x27xbf16> to vector<256x27xbf16>
    %c0_3 = arith.constant 0 : index
    %c0_4 = arith.constant 0 : index
    %5 = vector.load %arg4[%c0_3, %c0_4] : memref<27x256xbf16, #tpu.memory_space<vmem>>, vector<27x256xbf16>
    %cst = arith.constant dense<0.000000e+00> : vector<256x256xf32>
    %6 = tpu.matmul %4, %5, %cst {dimension_numbers = #tpu.dot_dimension_numbers<[1], [0], [0], [1], [0, 0, 1, 1], [], []>} : vector<256x27xbf16>, vector<27x256xbf16>, vector<256x256xf32> -> vector<256x256xf32>
    %c0_5 = arith.constant 0 : index
    %c0_6 = arith.constant 0 : index
    %7 = vector.load %arg5[%c0_5, %c0_6] : memref<1x256xf32, #tpu.memory_space<vmem>>, vector<1x256xf32>
    %8 = vector.broadcast %7 : vector<1x256xf32> to vector<256x256xf32>
    %9 = arith.addf %6, %8 : vector<256x256xf32>
    %cst_7 = arith.constant 0.000000e+00 : f32
    %10 = vector.broadcast %cst_7 : f32 to vector<256x256xf32>
    %11 = arith.maximumf %9, %10 : vector<256x256xf32>
    %c0_8 = arith.constant 0 : index
    %c0_9 = arith.constant 0 : index
    %12 = vector.load %arg7[%c0_8, %c0_9] : memref<2x256xf32, #tpu.memory_space<vmem>>, vector<2x256xf32>
    %13 = vector.shape_cast %11 : vector<256x256xf32> to vector<2x128x256xf32>
    %cst_10 = arith.constant dense<0.000000e+00> : vector<2x256xf32>
    %14 = vector.multi_reduction <add>, %13, %cst_10 [1] : vector<2x128x256xf32> to vector<2x256xf32>
    %15 = arith.addf %12, %14 : vector<2x256xf32>
    %c0_11 = arith.constant 0 : index
    %c0_12 = arith.constant 0 : index
    %16 = vector.load %arg7[%c0_11, %c0_12] : memref<2x256xf32, #tpu.memory_space<vmem>>, vector<2x256xf32>
    tpu.vector_store %arg7[%c0_11, %c0_12], %15 {strides = array<i32>} : memref<2x256xf32, #tpu.memory_space<vmem>>, vector<2x256xf32>,
    %c1_i32 = arith.constant 1 : i32
    %17 = arith.cmpi eq, %arg2, %c1_i32 : i32
    %18 = arith.extui %17 : i1 to i32
    %c0_i32_13 = arith.constant 0 : i32
    %19 = arith.cmpi ne, %18, %c0_i32_13 : i32
    scf.if %19 {
      %c0_14 = arith.constant 0 : index
      %c0_15 = arith.constant 0 : index
      %20 = vector.load %arg7[%c0_14, %c0_15] : memref<2x256xf32, #tpu.memory_space<vmem>>, vector<2x256xf32>
      %cst_16 = arith.constant 3.906250e-03 : f32
      %21 = vector.broadcast %cst_16 : f32 to vector<2x256xf32>
      %22 = arith.mulf %20, %21 : vector<2x256xf32>
      %c0_17 = arith.constant 0 : index
      %c0_18 = arith.constant 0 : index
      %23 = vector.load %arg6[%c0_17, %c0_18] : memref<2x256xf32, #tpu.memory_space<vmem>>, vector<2x256xf32>
      tpu.vector_store %arg6[%c0_17, %c0_18], %22 {strides = array<i32>} : memref<2x256xf32, #tpu.memory_space<vmem>>, vector<2x256xf32>,
    } else {
    }
    return
  }
  func.func @transform_0(%arg0: i32, %arg1: i32, %arg2: i32) -> (i32, i32, i32) {
    %c0_i32 = arith.constant 0 : i32
    %c0_i32_0 = arith.constant 0 : i32
    return %arg0, %arg2, %c0_i32 : i32, i32, i32
  }
  func.func @transform_1(%arg0: i32, %arg1: i32, %arg2: i32) -> (i32, i32) {
    %c0_i32 = arith.constant 0 : i32
    %c0_i32_0 = arith.constant 0 : i32
    return %c0_i32, %arg1 : i32, i32
  }
  func.func @transform_2(%arg0: i32, %arg1: i32, %arg2: i32) -> (i32, i32) {
    %c0_i32 = arith.constant 0 : i32
    %c0_i32_0 = arith.constant 0 : i32
    return %c0_i32, %arg1 : i32, i32
  }
  func.func @transform_3(%arg0: i32, %arg1: i32, %arg2: i32) -> (i32, i32) {
    %c0_i32 = arith.constant 0 : i32
    return %arg0, %arg1 : i32, i32
  }
}

</mosaic_0001>

<llo_original>
// kernel: tpu_custom_call.1
$region0: #{tpu_custom_call.1}
  #allocation0 [shape = 'u32[]', space=smem, size = 0x4, offset = 0x4, fixed_abs, tag = 'smem constant byte address 0x4 - core index']
  #allocation1 [shape = 'u32[144,128]{1,0:T(1,128)}', space=vmem, size = 0x12000, scoped, tag = 'internal scratch']
  #allocation2 [shape = 'f32[2,256]{1,0:T(2,128)}', space=vmem, size = 0x800, scoped, tag = 'scratch operand']
  %s0 = inlined_call_operand.vmem [shape: bf16[2,256,27], index: 0, kind: input, shape index: {}]
  %s1 = inlined_call_operand.vmem [shape: bf16[27,256], index: 1, kind: input, shape index: {}]
  %s2 = inlined_call_operand.vmem [shape: f32[1,256], index: 2, kind: input, shape index: {}]
  %s3 = inlined_call_operand.hbm [shape: f32[2,256], index: 3, kind: output, shape index: {}]
  %s4 = sld [smem:[#allocation0]]
  $region94: #{tpu_custom_call.1} parent=0
    _
  %s6 = ssub.s32 1, %s4
  %s7 = scalar_select 0, %s6, %s4
  $region1: #{tpu_custom_call.1} parent=0
    #allocation3 [shape = 'u8[131072]{0}', space=vmem, size = 0x20000, scoped, tag = 'input window, operand 0']
    #allocation4 [shape = 'u8[2048]{0}', space=vmem, size = 0x800, scoped, tag = 'output window, operand 0, single buffered']
    #allocation5 [shape = 's32[2]{0}', space=sflag, size = 0x8, scoped, tag = 'scoped memory for tpu_custom_call.1']
    %8 = vsyncpa [#allocation5], 0
    loop: start=0, step=1, limit=4
    $region2: #{tpu_custom_call.1} parent=1 // loop_pre_header
      _
    $region3: #{tpu_custom_call.1} parent=1 // loop_header
      %s10 = sphi 0, %s14
      %p11 = scmp.ge.s32.totalorder %s10, 4
      %s17 = sphi 0, %s36
      %s18 = sphi 0, %s32
      %s19 = sphi 0, %s28
      %s20 = sphi 0, %s17
      %s21 = sphi 0, %s18
      %s22 = sphi 0, %s19
      %s23 = sphi 0, %s20
      %s24 = sphi 0, %s21
      %s25 = sphi 0, %s22
      %s41 = sphi 0, %s43
      %s44 = sphi 0, %s41
      %s45 = sphi 0, %s44
      %s61 = sphi 0, %s45
      %s67 = sphi 0, %s69
      %s70 = sphi 0, %s67
      %s71 = sphi 0, %s70
      %s87 = sphi 0, %s71
      %s93 = sphi 0, %s95
      %s96 = sphi 0, %s93
      %s97 = sphi 0, %s96
      %s113 = sphi 0, %s97
      %s121 = sphi 0, %s123
      %s124 = sphi 0, %s121
      %s125 = sphi 0, %s124
      %s141 = sphi 0, %s125
    $region4: #{tpu_custom_call.1} parent=1 // loop_header_branch
      %13 = sbr.rel (%p11) target = $region8
    $region5: #{tpu_custom_call.1} parent=1 // loop_body
      %s15 = ssub.s32 %s10, 1
      %s16 = ssub.s32 %s10, 2
      %s26 = sadd.s32 1, %s19
      %p27 = scmp.ge.s32.totalorder %s26, 2
      %s28 = scalar_select %p27, 0, %s26
      %s29 = sadd.s32 1, %s18
      %s30 = scalar_select %p27, %s29, %s18
      %p31 = scmp.ge.s32.totalorder %s30, 1
      %s32 = scalar_select %p31, 0, %s30
      %s33 = sadd.s32 1, %s17
      %s34 = scalar_select %p31, %s33, %s17
      %p35 = scmp.ge.s32.totalorder %s34, 1
      %s36 = scalar_select %p35, 0, %s34
      %s37 = ssub.s32 %s17, %s36
      %s38 = ssub.s32 %s19, %s28
      %s39 = sor.u32 %s37, %s38
      %p40 = scmp.eq.s32.totalorder %s39, 0
      %s42 = sadd.s32 %s41, 1
      %s43 = scalar_select %p40, %s41, %s42
      %p46 = pneg %p40
      %p47 = scmp.eq.s32.totalorder %s10, 1
      %p48 = por %p46, %p47
      %p49 = scmp.ne.s32.totalorder %s41, %s44
      %p50 = scmp.eq.s32.totalorder %s10, 0
      %p51 = por %p49, %p50
      %p52 = scmp.ne.s32.totalorder %s41, %s44
      %p53 = scmp.eq.s32.totalorder %s15, 1
      %p54 = por %p52, %p53
      %p55 = scmp.ne.s32.totalorder %s44, %s45
      %p56 = scmp.eq.s32.totalorder %s15, 0
      %p57 = por %p55, %p56
      %p58 = scmp.ne.s32.totalorder %s44, %s45
      %p59 = scmp.eq.s32.totalorder %s16, 1
      %p60 = por %p58, %p59
      %p62 = scmp.ne.s32.totalorder %s45, %s61
      %p63 = scmp.eq.s32.totalorder %s16, 0
      %p64 = por %p62, %p63
      %s65 = ssub.s32 %s18, %s32
      %p66 = scmp.eq.s32.totalorder %s65, 0
      %s68 = sadd.s32 %s67, 1
      %s69 = scalar_select %p66, %s67, %s68
      %p72 = pneg %p66
      %p73 = scmp.eq.s32.totalorder %s10, 1
      %p74 = por %p72, %p73
      %p75 = scmp.ne.s32.totalorder %s67, %s70
      %p76 = scmp.eq.s32.totalorder %s10, 0
      %p77 = por %p75, %p76
      %p78 = scmp.ne.s32.totalorder %s67, %s70
      %p79 = scmp.eq.s32.totalorder %s15, 1
      %p80 = por %p78, %p79
      %p81 = scmp.ne.s32.totalorder %s70, %s71
      %p82 = scmp.eq.s32.totalorder %s15, 0
      %p83 = por %p81, %p82
      %p84 = scmp.ne.s32.totalorder %s70, %s71
      %p85 = scmp.eq.s32.totalorder %s16, 1
      %p86 = por %p84, %p85
      %p88 = scmp.ne.s32.totalorder %s71, %s87
      %p89 = scmp.eq.s32.totalorder %s16, 0
      %p90 = por %p88, %p89
      %s91 = ssub.s32 %s18, %s32
      %p92 = scmp.eq.s32.totalorder %s91, 0
      %s94 = sadd.s32 %s93, 1
      %s95 = scalar_select %p92, %s93, %s94
      %p98 = pneg %p92
      %p99 = scmp.eq.s32.totalorder %s10, 1
      %p100 = por %p98, %p99
      %p101 = scmp.ne.s32.totalorder %s93, %s96
      %p102 = scmp.eq.s32.totalorder %s10, 0
      %p103 = por %p101, %p102
      %p104 = scmp.ne.s32.totalorder %s93, %s96
      %p105 = scmp.eq.s32.totalorder %s15, 1
      %p106 = por %p104, %p105
      %p107 = scmp.ne.s32.totalorder %s96, %s97
      %p108 = scmp.eq.s32.totalorder %s15, 0
      %p109 = por %p107, %p108
      %p110 = scmp.ne.s32.totalorder %s96, %s97
      %p111 = scmp.eq.s32.totalorder %s16, 1
      %p112 = por %p110, %p111
      %p114 = scmp.ne.s32.totalorder %s97, %s113
      %p115 = scmp.eq.s32.totalorder %s16, 0
      %p116 = por %p114, %p115
      %s117 = ssub.s32 %s17, %s36
      %s118 = ssub.s32 %s18, %s32
      %s119 = sor.u32 %s117, %s118
      %p120 = scmp.eq.s32.totalorder %s119, 0
      %s122 = sadd.s32 %s121, 1
      %s123 = scalar_select %p120, %s121, %s122
      %p126 = pneg %p120
      %p127 = scmp.eq.s32.totalorder %s10, 1
      %p128 = por %p126, %p127
      %p129 = scmp.ne.s32.totalorder %s121, %s124
      %p130 = scmp.eq.s32.totalorder %s10, 0
      %p131 = por %p129, %p130
      %p132 = scmp.ne.s32.totalorder %s121, %s124
      %p133 = scmp.eq.s32.totalorder %s15, 1
      %p134 = por %p132, %p133
      %p135 = scmp.ne.s32.totalorder %s124, %s125
      %p136 = scmp.eq.s32.totalorder %s15, 0
      %p137 = por %p135, %p136
      %p138 = scmp.ne.s32.totalorder %s124, %s125
      %p139 = scmp.eq.s32.totalorder %s16, 1
      %p140 = por %p138, %p139
      %p142 = scmp.ne.s32.totalorder %s125, %s141
      %p143 = scmp.eq.s32.totalorder %s16, 0
      %p144 = por %p142, %p143
      %p145 = scmp.le.s32.totalorder 1, %s10
      %p146 = scmp.lt.s32.totalorder %s10, 3
      %p147 = pnand %p145, %p146
      %p148 = pneg %p147
      // Predicated region
      $region9: #{tpu_custom_call.1} parent=5 // pred_check
        _
      $region10: #{tpu_custom_call.1} parent=5 // pred_check_branch
        %150 = sbr.rel (%p147) target = $region12
      $region11: #{tpu_custom_call.1} parent=5 // pred_region
        %s151 = ssub.s32 %s10, 1
        // Predicated region
        $region13: #{tpu_custom_call.1} parent=11 // pred_check
          %p152 = pneg %p83
        $region14: #{tpu_custom_call.1} parent=11 // pred_check_branch
          %154 = sbr.rel (%p152) target = $region16
        $region15: #{tpu_custom_call.1} parent=11 // pred_region
          %s155 = smul.u32 2, %s21
          %p156 = scmp.lt.s32.totalorder %s155, 1
          %s157 = scalar_select %p156, %s155, 1
          %s158 = smul.addr %s157, 4
          %s159 = scalar_lea.vmem %s1, %s158
          %s160 = smul.u32 2, %s21
        $region16: #{tpu_custom_call.1} parent=11 // pred_fallthru
          _
        // Predicated region
        $region17: #{tpu_custom_call.1} parent=11 // pred_check
          %p161 = pneg %p109
        $region18: #{tpu_custom_call.1} parent=11 // pred_check_branch
          %163 = sbr.rel (%p161) target = $region20
        $region19: #{tpu_custom_call.1} parent=11 // pred_region
          %s164 = smul.u32 2, %s21
          %p165 = scmp.lt.s32.totalorder %s164, 1
          %s166 = scalar_select %p165, %s164, 1
          %s167 = scalar_lea.vmem %s2, %s166
          %s168 = smul.u32 2, %s21
        $region20: #{tpu_custom_call.1} parent=11 // pred_fallthru
          _
      $region12: #{tpu_custom_call.1} parent=5 // pred_fallthru
        _
      %p169 = scmp.lt.s32.totalorder %s10, 2
      // Predicated region
      $region21: #{tpu_custom_call.1} parent=5 // pred_check
        %p170 = pneg %p169
      $region22: #{tpu_custom_call.1} parent=5 // pred_check_branch
        %172 = sbr.rel (%p170) target = $region24
      $region23: #{tpu_custom_call.1} parent=5 // pred_region
        // Predicated region
        $region25: #{tpu_custom_call.1} parent=23 // pred_check
          %p173 = pneg %p51
        $region26: #{tpu_custom_call.1} parent=23 // pred_check_branch
          %175 = sbr.rel (%p173) target = $region28
        $region27: #{tpu_custom_call.1} parent=23 // pred_region
          %s176 = sand.u32 %s41, 1
          %s177 = sand.u32 %s41, 1
          %s178 = smul.addr %s177, 128
          %s179 = scalar_lea.vmem [#allocation3], %s178
          %s180 = smul.u32 2, %s17
          %s181 = smul.u32 16, %s19
          %s182 = smul.addr %s180, 32
          %s183 = sadd.s32 %s181, %s182
          %s184 = smul.addr %s183, 4
          %s185 = scalar_lea.vmem %s0, %s184
          // Predicated region
          $region29: #{tpu_custom_call.1} parent=27 // pred_check
            _
          $region30: #{tpu_custom_call.1} parent=27 // pred_check_branch
            %187 = sbr.rel (0) target = $region32
          $region31: #{tpu_custom_call.1} parent=27 // pred_region
            // Predicated region
            $region33: #{tpu_custom_call.1} parent=31 // pred_check
              _
            $region34: #{tpu_custom_call.1} parent=31 // pred_check_branch
              %189 = sbr.rel target = $region36
            $region35: #{tpu_custom_call.1} parent=31 // pred_region
              // Predicated region
              $region48: #{tpu_custom_call.1} parent=35 // pred_check
                _
              $region49: #{tpu_custom_call.1} parent=35 // pred_check_branch
                %266 = sbr.rel (0) target = $region51
              $region50: #{tpu_custom_call.1} parent=35 // pred_region
                loop: start=0, step=1, limit=1
                $region52: #{tpu_custom_call.1} parent=50 // loop_pre_header
                  _
                $region53: #{tpu_custom_call.1} parent=50 // loop_header
                  %s268 = sphi 0, %s272
                  %p269 = scmp.ge.s32.totalorder %s268, 1
                  %s273 = sphi %s185, %s185
                  %s274 = sphi %s179, %s179
                $region54: #{tpu_custom_call.1} parent=50 // loop_header_branch
                  %271 = sbr.rel (%p269) target = $region58
                $region55: #{tpu_custom_call.1} parent=50 // loop_body
                  _
                $region56: #{tpu_custom_call.1} parent=50 // loop_footer
                  %s272 = sadd.s32 1, %s268
                $region57: #{tpu_custom_call.1} parent=50 // loop_footer_branch
                  %267 = sbr.rel target = $region53
                $region58: #{tpu_custom_call.1} parent=50 // loop_exit
                  _
                loop: start=0, step=1, limit=1
                $region59: #{tpu_custom_call.1} parent=50 // loop_pre_header
                  _
                $region60: #{tpu_custom_call.1} parent=50 // loop_header
                  %s277 = sphi 0, %s281
                  %p278 = scmp.ge.s32.totalorder %s277, 1
                  %s282 = sphi %s185, %s185
                  %s283 = sphi %s179, %s179
                $region61: #{tpu_custom_call.1} parent=50 // loop_header_branch
                  %280 = sbr.rel (%p278) target = $region65
                $region62: #{tpu_custom_call.1} parent=50 // loop_body
                  %v284 = vld [vmem:[%s282] sm:$0xf]
                  %285 = vst [vmem:[%s283] sm:$0xf] %v284
                  %v286 = vld [vmem:[%s282 + $0x4] sm:$0xf]
                  %287 = vst [vmem:[%s283 + $0x4] sm:$0xf] %v286
                  %v288 = vld [vmem:[%s282 + $0x8] sm:$0xf]
                  %289 = vst [vmem:[%s283 + $0x8] sm:$0xf] %v288
                  %v290 = vld [vmem:[%s282 + $0xc] sm:$0xf]
                  %291 = vst [vmem:[%s283 + $0xc] sm:$0xf] %v290
                  %v292 = vld [vmem:[%s282 + $0x10] sm:$0xf]
                  %293 = vst [vmem:[%s283 + $0x10] sm:$0xf] %v292
                  %v294 = vld [vmem:[%s282 + $0x14] sm:$0xf]
                  %295 = vst [vmem:[%s283 + $0x14] sm:$0xf] %v294
                  %v296 = vld [vmem:[%s282 + $0x18] sm:$0xf]
                  %297 = vst [vmem:[%s283 + $0x18] sm:$0xf] %v296
                  %v298 = vld [vmem:[%s282 + $0x1c] sm:$0xf]
                  %299 = vst [vmem:[%s283 + $0x1c] sm:$0xf] %v298
                  %v300 = vld [vmem:[%s282 + $0x20] sm:$0xf]
                  %301 = vst [vmem:[%s283 + $0x20] sm:$0xf] %v300
                  %v302 = vld [vmem:[%s282 + $0x24] sm:$0xf]
                  %303 = vst [vmem:[%s283 + $0x24] sm:$0xf] %v302
                  %v304 = vld [vmem:[%s282 + $0x28] sm:$0xf]
                  %305 = vst [vmem:[%s283 + $0x28] sm:$0xf] %v304
                  %v306 = vld [vmem:[%s282 + $0x2c] sm:$0xf]
                  %307 = vst [vmem:[%s283 + $0x2c] sm:$0xf] %v306
                  %v308 = vld [vmem:[%s282 + $0x30] sm:$0xf]
                  %309 = vst [vmem:[%s283 + $0x30] sm:$0xf] %v308
                  %v310 = vld [vmem:[%s282 + $0x34] sm:$0xf]
                  %311 = vst [vmem:[%s283 + $0x34] sm:$0xf] %v310
                  %v312 = vld [vmem:[%s282 + $0x38] sm:$0xf]
                  %313 = vst [vmem:[%s283 + $0x38] sm:$0xf] %v312
                  %v314 = vld [vmem:[%s282 + $0x3c] sm:$0xf]
                  %315 = vst [vmem:[%s283 + $0x3c] sm:$0xf] %v314
                  %v316 = vld [vmem:[%s282 + $0x80] sm:$0xf]
                  %317 = vst [vmem:[%s283 + $0x40] sm:$0xf] %v316
                  %v318 = vld [vmem:[%s282 + $0x84] sm:$0xf]
                  %319 = vst [vmem:[%s283 + $0x44] sm:$0xf] %v318
                  %v320 = vld [vmem:[%s282 + $0x88] sm:$0xf]
                  %321 = vst [vmem:[%s283 + $0x48] sm:$0xf] %v320
                  %v322 = vld [vmem:[%s282 + $0x8c] sm:$0xf]
                  %323 = vst [vmem:[%s283 + $0x4c] sm:$0xf] %v322
                  %v324 = vld [vmem:[%s282 + $0x90] sm:$0xf]
                  %325 = vst [vmem:[%s283 + $0x50] sm:$0xf] %v324
                  %v326 = vld [vmem:[%s282 + $0x94] sm:$0xf]
                  %327 = vst [vmem:[%s283 + $0x54] sm:$0xf] %v326
                  %v328 = vld [vmem:[%s282 + $0x98] sm:$0xf]
                  %329 = vst [vmem:[%s283 + $0x58] sm:$0xf] %v328
                  %v330 = vld [vmem:[%s282 + $0x9c] sm:$0xf]
                  %331 = vst [vmem:[%s283 + $0x5c] sm:$0xf] %v330
                  %v332 = vld [vmem:[%s282 + $0xa0] sm:$0xf]
                  %333 = vst [vmem:[%s283 + $0x60] sm:$0xf] %v332
                  %v334 = vld [vmem:[%s282 + $0xa4] sm:$0xf]
                  %335 = vst [vmem:[%s283 + $0x64] sm:$0xf] %v334
                  %v336 = vld [vmem:[%s282 + $0xa8] sm:$0xf]
                  %337 = vst [vmem:[%s283 + $0x68] sm:$0xf] %v336
                  %v338 = vld [vmem:[%s282 + $0xac] sm:$0xf]
                  %339 = vst [vmem:[%s283 + $0x6c] sm:$0xf] %v338
                  %v340 = vld [vmem:[%s282 + $0xb0] sm:$0xf]
                  %341 = vst [vmem:[%s283 + $0x70] sm:$0xf] %v340
                  %v342 = vld [vmem:[%s282 + $0xb4] sm:$0xf]
                  %343 = vst [vmem:[%s283 + $0x74] sm:$0xf] %v342
                  %v344 = vld [vmem:[%s282 + $0xb8] sm:$0xf]
                  %345 = vst [vmem:[%s283 + $0x78] sm:$0xf] %v344
                  %v346 = vld [vmem:[%s282 + $0xbc] sm:$0xf]
                  %347 = vst [vmem:[%s283 + $0x7c] sm:$0xf] %v346
                $region63: #{tpu_custom_call.1} parent=50 // loop_footer
                  %s281 = sadd.s32 1, %s277
                $region64: #{tpu_custom_call.1} parent=50 // loop_footer_branch
                  %276 = sbr.rel target = $region60
                $region65: #{tpu_custom_call.1} parent=50 // loop_exit
                  _
              $region51: #{tpu_custom_call.1} parent=35 // pred_fallthru
                _
            $region36: #{tpu_custom_call.1} parent=31 // pred_fallthru
              _
            // Predicated region
            $region37: #{tpu_custom_call.1} parent=31 // pred_check
              _
            $region38: #{tpu_custom_call.1} parent=31 // pred_check_branch
              %191 = sbr.rel (0) target = $region40
            $region39: #{tpu_custom_call.1} parent=31 // pred_region
              loop: start=0, step=1, limit=1
              $region41: #{tpu_custom_call.1} parent=39 // loop_pre_header
                _
              $region42: #{tpu_custom_call.1} parent=39 // loop_header
                %s194 = sphi 0, %s198
                %p195 = scmp.ge.s32.totalorder %s194, 1
                %s199 = sphi %s185, %s185
                %s200 = sphi %s179, %s179
              $region43: #{tpu_custom_call.1} parent=39 // loop_header_branch
                %197 = sbr.rel (%p195) target = $region47
              $region44: #{tpu_custom_call.1} parent=39 // loop_body
                %v201 = vld [vmem:[%s199] sm:$0xf]
                %202 = vst [vmem:[%s200] sm:$0xf] %v201
                %v203 = vld [vmem:[%s199 + $0x4] sm:$0xf]
                %204 = vst [vmem:[%s200 + $0x4] sm:$0xf] %v203
                %v205 = vld [vmem:[%s199 + $0x8] sm:$0xf]
                %206 = vst [vmem:[%s200 + $0x8] sm:$0xf] %v205
                %v207 = vld [vmem:[%s199 + $0xc] sm:$0xf]
                %208 = vst [vmem:[%s200 + $0xc] sm:$0xf] %v207
                %v209 = vld [vmem:[%s199 + $0x10] sm:$0xf]
                %210 = vst [vmem:[%s200 + $0x10] sm:$0xf] %v209
                %v211 = vld [vmem:[%s199 + $0x14] sm:$0xf]
                %212 = vst [vmem:[%s200 + $0x14] sm:$0xf] %v211
                %v213 = vld [vmem:[%s199 + $0x18] sm:$0xf]
                %214 = vst [vmem:[%s200 + $0x18] sm:$0xf] %v213
                %v215 = vld [vmem:[%s199 + $0x1c] sm:$0xf]
                %216 = vst [vmem:[%s200 + $0x1c] sm:$0xf] %v215
                %v217 = vld [vmem:[%s199 + $0x20] sm:$0xf]
                %218 = vst [vmem:[%s200 + $0x20] sm:$0xf] %v217
                %v219 = vld [vmem:[%s199 + $0x24] sm:$0xf]
                %220 = vst [vmem:[%s200 + $0x24] sm:$0xf] %v219
                %v221 = vld [vmem:[%s199 + $0x28] sm:$0xf]
                %222 = vst [vmem:[%s200 + $0x28] sm:$0xf] %v221
                %v223 = vld [vmem:[%s199 + $0x2c] sm:$0xf]
                %224 = vst [vmem:[%s200 + $0x2c] sm:$0xf] %v223
                %v225 = vld [vmem:[%s199 + $0x30] sm:$0xf]
                %226 = vst [vmem:[%s200 + $0x30] sm:$0xf] %v225
                %v227 = vld [vmem:[%s199 + $0x34] sm:$0xf]
                %228 = vst [vmem:[%s200 + $0x34] sm:$0xf] %v227
                %v229 = vld [vmem:[%s199 + $0x38] sm:$0xf]
                %230 = vst [vmem:[%s200 + $0x38] sm:$0xf] %v229
                %v231 = vld [vmem:[%s199 + $0x3c] sm:$0xf]
                %232 = vst [vmem:[%s200 + $0x3c] sm:$0xf] %v231
                %v233 = vld [vmem:[%s199 + $0x80] sm:$0xf]
                %234 = vst [vmem:[%s200 + $0x40] sm:$0xf] %v233
                %v235 = vld [vmem:[%s199 + $0x84] sm:$0xf]
                %236 = vst [vmem:[%s200 + $0x44] sm:$0xf] %v235
                %v237 = vld [vmem:[%s199 + $0x88] sm:$0xf]
                %238 = vst [vmem:[%s200 + $0x48] sm:$0xf] %v237
                %v239 = vld [vmem:[%s199 + $0x8c] sm:$0xf]
                %240 = vst [vmem:[%s200 + $0x4c] sm:$0xf] %v239
                %v241 = vld [vmem:[%s199 + $0x90] sm:$0xf]
                %242 = vst [vmem:[%s200 + $0x50] sm:$0xf] %v241
                %v243 = vld [vmem:[%s199 + $0x94] sm:$0xf]
                %244 = vst [vmem:[%s200 + $0x54] sm:$0xf] %v243
                %v245 = vld [vmem:[%s199 + $0x98] sm:$0xf]
                %246 = vst [vmem:[%s200 + $0x58] sm:$0xf] %v245
                %v247 = vld [vmem:[%s199 + $0x9c] sm:$0xf]
                %248 = vst [vmem:[%s200 + $0x5c] sm:$0xf] %v247
                %v249 = vld [vmem:[%s199 + $0xa0] sm:$0xf]
                %250 = vst [vmem:[%s200 + $0x60] sm:$0xf] %v249
                %v251 = vld [vmem:[%s199 + $0xa4] sm:$0xf]
                %252 = vst [vmem:[%s200 + $0x64] sm:$0xf] %v251
                %v253 = vld [vmem:[%s199 + $0xa8] sm:$0xf]
                %254 = vst [vmem:[%s200 + $0x68] sm:$0xf] %v253
                %v255 = vld [vmem:[%s199 + $0xac] sm:$0xf]
                %256 = vst [vmem:[%s200 + $0x6c] sm:$0xf] %v255
                %v257 = vld [vmem:[%s199 + $0xb0] sm:$0xf]
                %258 = vst [vmem:[%s200 + $0x70] sm:$0xf] %v257
                %v259 = vld [vmem:[%s199 + $0xb4] sm:$0xf]
                %260 = vst [vmem:[%s200 + $0x74] sm:$0xf] %v259
                %v261 = vld [vmem:[%s199 + $0xb8] sm:$0xf]
                %262 = vst [vmem:[%s200 + $0x78] sm:$0xf] %v261
                %v263 = vld [vmem:[%s199 + $0xbc] sm:$0xf]
                %264 = vst [vmem:[%s200 + $0x7c] sm:$0xf] %v263
              $region45: #{tpu_custom_call.1} parent=39 // loop_footer
                %s198 = sadd.s32 1, %s194
              $region46: #{tpu_custom_call.1} parent=39 // loop_footer_branch
                %193 = sbr.rel target = $region42
              $region47: #{tpu_custom_call.1} parent=39 // loop_exit
                _
            $region40: #{tpu_custom_call.1} parent=31 // pred_fallthru
              _
          $region32: #{tpu_custom_call.1} parent=27 // pred_fallthru
            _
          %348 = vnop
        $region28: #{tpu_custom_call.1} parent=23 // pred_fallthru
          _
      $region24: #{tpu_custom_call.1} parent=5 // pred_fallthru
        _
      %p349 = scmp.le.s32.totalorder 1, %s10
      %p350 = scmp.lt.s32.totalorder %s10, 3
      %p351 = pnand %p349, %p350
      %p352 = pneg %p351
      // Predicated region
      $region66: #{tpu_custom_call.1} parent=5 // pred_check
        _
      $region67: #{tpu_custom_call.1} parent=5 // pred_check_branch
        %354 = sbr.rel (%p351) target = $region69
      $region68: #{tpu_custom_call.1} parent=5 // pred_region
        %s355 = ssub.s32 %s10, 1
        %s356 = sand.u32 %s44, 1
        %s357 = sand.u32 %s44, 1
        %s358 = smul.addr %s357, 128
        %s359 = scalar_lea.vmem [#allocation3], %s358
        // Predicated region
        $region70: #{tpu_custom_call.1} parent=68 // pred_check
          %p360 = pneg %p57
        $region71: #{tpu_custom_call.1} parent=68 // pred_check_branch
          %362 = sbr.rel (%p360) target = $region73
        $region72: #{tpu_custom_call.1} parent=68 // pred_region
          _
        $region73: #{tpu_custom_call.1} parent=68 // pred_fallthru
          _
        %s363 = sand.u32 %s44, 1
        %s364 = sand.u32 %s44, 1
        %s365 = smul.addr %s364, 128
        %s366 = scalar_lea.vmem [#allocation3], %s365
        %p367 = pneg %p57
        %p368 = pneg %p54
        %s369 = smul.u32 2, %s21
        %p370 = scmp.lt.s32.totalorder %s369, 1
        %s371 = scalar_select %p370, %s369, 1
        %s372 = smul.addr %s371, 4
        %s373 = scalar_lea.vmem %s1, %s372
        %p374 = pneg %p83
        %p375 = pneg %p80
        %s376 = smul.u32 2, %s21
        %p377 = scmp.lt.s32.totalorder %s376, 1
        %s378 = scalar_select %p377, %s376, 1
        %s379 = scalar_lea.vmem %s2, %s378
        %p380 = pneg %p109
        %p381 = pneg %p106
        %p382 = pneg %p137
        %p383 = pneg %p134
        %s384 = smul.u32 2, %s20
        %s385 = smul.u32 16, %s22
        %s386 = smul.u32 2, %s21
        %p387 = scmp.lt.s32.totalorder %s386, 1
        %s388 = scalar_select %p387, %s386, 1
        %s389 = smul.addr %s388, 4
        %s390 = scalar_lea.vmem %s1, %s389
        %s391 = smul.u32 2, %s21
        %s392 = smul.u32 2, %s21
        %p393 = scmp.lt.s32.totalorder %s392, 1
        %s394 = scalar_select %p393, %s392, 1
        %s395 = scalar_lea.vmem %s2, %s394
        %s396 = smul.u32 2, %s21
        %s397 = smul.u32 2, %s21
        %p399 = scmp.eq.s32.totalorder %s22, 0
        // Predicated region
        $region74: #{tpu_custom_call.1} parent=68 // pred_check
          %p400 = pneg %p399
        $region75: #{tpu_custom_call.1} parent=68 // pred_check_branch
          %402 = sbr.rel (%p400) target = $region77
        $region76: #{tpu_custom_call.1} parent=68 // pred_region
          %403 = vst [vmem:[#allocation2] sm:$0xf] 0.0
        $region77: #{tpu_custom_call.1} parent=68 // pred_fallthru
          _
        %v404 = vld [vmem:[%s359] sm:$0xf]
        %v405 = vld [vmem:[%s359 + $0x4] sm:$0xf]
        %v406 = vld [vmem:[%s359 + $0x8] sm:$0xf]
        %v407 = vld [vmem:[%s359 + $0xc] sm:$0xf]
        %v408 = vld [vmem:[%s359 + $0x10] sm:$0xf]
        %v409 = vld [vmem:[%s359 + $0x14] sm:$0xf]
        %v410 = vld [vmem:[%s359 + $0x18] sm:$0xf]
        %v411 = vld [vmem:[%s359 + $0x1c] sm:$0xf]
        %v412 = vld [vmem:[%s359 + $0x20] sm:$0xf]
        %v413 = vld [vmem:[%s359 + $0x24] sm:$0xf]
        %v414 = vld [vmem:[%s359 + $0x28] sm:$0xf]
        %v415 = vld [vmem:[%s359 + $0x2c] sm:$0xf]
        %v416 = vld [vmem:[%s359 + $0x30] sm:$0xf]
        %v417 = vld [vmem:[%s359 + $0x34] sm:$0xf]
        %v418 = vld [vmem:[%s359 + $0x38] sm:$0xf]
        %v419 = vld [vmem:[%s359 + $0x3c] sm:$0xf]
        %v420 = vld [vmem:[%s359 + $0x40] sm:$0xf]
        %v421 = vld [vmem:[%s359 + $0x44] sm:$0xf]
        %v422 = vld [vmem:[%s359 + $0x48] sm:$0xf]
        %v423 = vld [vmem:[%s359 + $0x4c] sm:$0xf]
        %v424 = vld [vmem:[%s359 + $0x50] sm:$0xf]
        %v425 = vld [vmem:[%s359 + $0x54] sm:$0xf]
        %v426 = vld [vmem:[%s359 + $0x58] sm:$0xf]
        %v427 = vld [vmem:[%s359 + $0x5c] sm:$0xf]
        %v428 = vld [vmem:[%s359 + $0x60] sm:$0xf]
        %v429 = vld [vmem:[%s359 + $0x64] sm:$0xf]
        %v430 = vld [vmem:[%s359 + $0x68] sm:$0xf]
        %v431 = vld [vmem:[%s359 + $0x6c] sm:$0xf]
        %v432 = vld [vmem:[%s359 + $0x70] sm:$0xf]
        %v433 = vld [vmem:[%s359 + $0x74] sm:$0xf]
        %v434 = vld [vmem:[%s359 + $0x78] sm:$0xf]
        %v435 = vld [vmem:[%s359 + $0x7c] sm:$0xf]
        %v436 = vld [vmem:[%s390] sm:$0xff]
        %v437 = vld [vmem:[%s390 + $0x8] sm:$0xff]
        %v438 = vld [vmem:[%s390 + $0x10] sm:$0xff]
        %v439 = vld [vmem:[%s390 + $0x18] sm:$0x33]
        %v440 = vld [vmem:[%s395] sm:$0x3]
        %v442 = vlaneseq
        %v443 = vshrl.u32 %v442, 7
        %v444 = vsub.s32 0, %v443
        %v445 = vrot.slane %v440, %v444
        %v446 = vlaneseq
        %v447 = vshrl.u32 %v446, 7
        %v448 = vsub.s32 1, %v447
        %v449 = vrot.slane %v440, %v448
        %v484 = vunpack.c.l.b16 %v404
        %v485 = vunpack.c.l.b16 %v405
        %v486 = vunpack.c.l.b16 %v406
        %v487 = vunpack.c.l.b16 %v407
        %v488 = vunpack.c.l.b16 %v408
        %v489 = vunpack.c.l.b16 %v409
        %v490 = vunpack.c.l.b16 %v410
        %v491 = vunpack.c.l.b16 %v411
        %v492 = vunpack.c.l.b16 %v412
        %v493 = vunpack.c.l.b16 %v413
        %v494 = vunpack.c.l.b16 %v414
        %v495 = vunpack.c.l.b16 %v415
        %v496 = vunpack.c.l.b16 %v416
        %v497 = vunpack.c.l.b16 %v417
        %v498 = vunpack.c.l.b16 %v418
        %v499 = vunpack.c.l.b16 %v419
        %v500 = vunpack.c.l.b16 %v420
        %v501 = vunpack.c.l.b16 %v421
        %v502 = vunpack.c.l.b16 %v422
        %v503 = vunpack.c.l.b16 %v423
        %v504 = vunpack.c.l.b16 %v424
        %v505 = vunpack.c.l.b16 %v425
        %v506 = vunpack.c.l.b16 %v426
        %v507 = vunpack.c.l.b16 %v427
        %v508 = vunpack.c.l.b16 %v428
        %v509 = vunpack.c.l.b16 %v429
        %v510 = vunpack.c.l.b16 %v430
        %v511 = vunpack.c.l.b16 %v431
        %v512 = vunpack.c.l.b16 %v432
        %v513 = vunpack.c.l.b16 %v433
        %v514 = vunpack.c.l.b16 %v434
        %v515 = vunpack.c.l.b16 %v435
        %v516 = vpack.c.b16 %v485, %v484
        %v517 = vpack.c.b16 %v487, %v486
        %v518 = vpack.c.b16 %v489, %v488
        %v519 = vpack.c.b16 %v491, %v490
        %v520 = vpack.c.b16 %v493, %v492
        %v521 = vpack.c.b16 %v495, %v494
        %v522 = vpack.c.b16 %v497, %v496
        %v523 = vpack.c.b16 %v499, %v498
        %v524 = vpack.c.b16 %v501, %v500
        %v525 = vpack.c.b16 %v503, %v502
        %v526 = vpack.c.b16 %v505, %v504
        %v527 = vpack.c.b16 %v507, %v506
        %v528 = vpack.c.b16 %v509, %v508
        %v529 = vpack.c.b16 %v511, %v510
        %v530 = vpack.c.b16 %v513, %v512
        %v531 = vpack.c.b16 %v515, %v514
        %v536 = vunpack.c.l.b16 %v436
        %v537 = vunpack.c.h.b16 %v436
        %v538 = vunpack.c.l.b16 %v437
        %v539 = vunpack.c.h.b16 %v437
        %v540 = vunpack.c.l.b16 %v438
        %v541 = vunpack.c.h.b16 %v438
        %v542 = vunpack.c.l.b16 %v439
        %v543 = vunpack.c.h.b16 %v439
        %v544 = vpack.c.b16 %v538, %v536
        %v545 = vpack.c.b16 %v539, %v537
        %v546 = vpack.c.b16 %v542, %v540
        %v547 = vpack.c.b16 %v543, %v541
        %vm550 = vcmask 220160
        %v552 = vsel %vm550, %v516, 0
        %v555 = vsel %vm550, %v517, 0
        %v558 = vsel %vm550, %v518, 0
        %v561 = vsel %vm550, %v519, 0
        %v564 = vsel %vm550, %v520, 0
        %v567 = vsel %vm550, %v521, 0
        %v570 = vsel %vm550, %v522, 0
        %v573 = vsel %vm550, %v523, 0
        %v576 = vsel %vm550, %v524, 0
        %v579 = vsel %vm550, %v525, 0
        %v582 = vsel %vm550, %v526, 0
        %v585 = vsel %vm550, %v527, 0
        %v588 = vsel %vm550, %v528, 0
        %v591 = vsel %vm550, %v529, 0
        %v594 = vsel %vm550, %v530, 0
        %v597 = vsel %vm550, %v531, 0
        %vm599 = vcmask 1044480
        %vm600 = vcmask 1045504
        %v601 = vsel %vm599, 4294967295, 65535
        %v602 = vsel %vm600, %v601, 0
        %v604 = vand.u32 %v546, %v602
        %v607 = vand.u32 %v547, %v602
        %609 = vmatprep.subr.bf16.mxu0 %v545
        %610 = vmatpush1.bf16.msra.mxu0 %v544
        %611 = vmatprep.subr.bf16.mxu0 %v607
        %612 = vmatpush1.bf16.msra.mxu0 %v604
        %613 = vmatprep.subr.bf16.mxu0 0
        %614 = vmatpush1.bf16.msra.mxu0 0
        %615 = vmatprep.subr.bf16.mxu0 0
        %616 = vmatpush1.bf16.msra.mxu0 0
        %617 = vmatprep.subr.bf16.mxu0 0
        %618 = vmatpush1.bf16.msra.mxu0 0
        %619 = vmatprep.subr.bf16.mxu0 0
        %620 = vmatpush1.bf16.msra.mxu0 0
        %621 = vmatprep.subr.bf16.mxu0 0
        %622 = vmatpush1.bf16.msra.mxu0 0
        %623 = vmatprep.subr.bf16.mxu0 0
        %624 = vmatpush1.bf16.msra.mxu0 0
        %625 = vmatprep.subr.bf16.mxu0 0
        %626 = vmatpush1.bf16.msra.mxu0 0
        %627 = vmatprep.subr.bf16.mxu0 0
        %628 = vmatpush1.bf16.msra.mxu0 0
        %629 = vmatprep.subr.bf16.mxu0 0
        %630 = vmatpush1.bf16.msra.mxu0 0
        %631 = vmatprep.subr.bf16.mxu0 0
        %632 = vmatpush1.bf16.msra.mxu0 0
        %633 = vmatprep.subr.bf16.mxu0 0
        %634 = vmatpush1.bf16.msra.mxu0 0
        %635 = vmatprep.subr.bf16.mxu0 0
        %636 = vmatpush1.bf16.msra.mxu0 0
        %637 = vmatprep.subr.bf16.mxu0 0
        %638 = vmatpush1.bf16.msra.mxu0 0
        %639 = vmatprep.subr.bf16.mxu0 0
        %640 = vmatpush1.bf16.msra.mxu0 0
        %641 = vmatprep.mubr.bf16.mxu0 0
        %642 = vmatmul.mubr.bf16.gmra.mrb[0].mxu0 %v552
        %v643 = vpop.f32.mrb[0].mxu0
        %v644 = vadd.f32 %v445, %v643
        %v645 = vpop.f32.mrb[0].mxu0
        %v646 = vadd.f32 %v449, %v645
        %v647 = vpop.f32.mrb[0].mxu0
        %v648 = vadd.f32 %v445, %v647
        %v649 = vpop.f32.mrb[0].mxu0
        %v650 = vadd.f32 %v449, %v649
        %651 = vmatprep.mubr.bf16.mxu0 0
        %652 = vmatmul.mubr.bf16.gmra.mrb[0].mxu0 %v555
        %v653 = vpop.f32.mrb[0].mxu0
        %v654 = vadd.f32 %v445, %v653
        %v655 = vpop.f32.mrb[0].mxu0
        %v656 = vadd.f32 %v449, %v655
        %v657 = vpop.f32.mrb[0].mxu0
        %v658 = vadd.f32 %v445, %v657
        %v659 = vpop.f32.mrb[0].mxu0
        %v660 = vadd.f32 %v449, %v659
        %661 = vmatprep.mubr.bf16.mxu0 0
        %662 = vmatmul.mubr.bf16.gmra.mrb[0].mxu0 %v558
        %v663 = vpop.f32.mrb[0].mxu0
        %v664 = vadd.f32 %v445, %v663
        %v665 = vpop.f32.mrb[0].mxu0
        %v666 = vadd.f32 %v449, %v665
        %v667 = vpop.f32.mrb[0].mxu0
        %v668 = vadd.f32 %v445, %v667
        %v669 = vpop.f32.mrb[0].mxu0
        %v670 = vadd.f32 %v449, %v669
        %671 = vmatprep.mubr.bf16.mxu0 0
        %672 = vmatmul.mubr.bf16.gmra.mrb[0].mxu0 %v561
        %v673 = vpop.f32.mrb[0].mxu0
        %v674 = vadd.f32 %v445, %v673
        %v675 = vpop.f32.mrb[0].mxu0
        %v676 = vadd.f32 %v449, %v675
        %v677 = vpop.f32.mrb[0].mxu0
        %v678 = vadd.f32 %v445, %v677
        %v679 = vpop.f32.mrb[0].mxu0
        %v680 = vadd.f32 %v449, %v679
        %681 = vmatprep.mubr.bf16.mxu0 0
        %682 = vmatmul.mubr.bf16.gmra.mrb[0].mxu0 %v564
        %v683 = vpop.f32.mrb[0].mxu0
        %v684 = vadd.f32 %v445, %v683
        %v685 = vpop.f32.mrb[0].mxu0
        %v686 = vadd.f32 %v449, %v685
        %v687 = vpop.f32.mrb[0].mxu0
        %v688 = vadd.f32 %v445, %v687
        %v689 = vpop.f32.mrb[0].mxu0
        %v690 = vadd.f32 %v449, %v689
        %691 = vmatprep.mubr.bf16.mxu0 0
        %692 = vmatmul.mubr.bf16.gmra.mrb[0].mxu0 %v567
        %v693 = vpop.f32.mrb[0].mxu0
        %v694 = vadd.f32 %v445, %v693
        %v695 = vpop.f32.mrb[0].mxu0
        %v696 = vadd.f32 %v449, %v695
        %v697 = vpop.f32.mrb[0].mxu0
        %v698 = vadd.f32 %v445, %v697
        %v699 = vpop.f32.mrb[0].mxu0
        %v700 = vadd.f32 %v449, %v699
        %701 = vmatprep.mubr.bf16.mxu0 0
        %702 = vmatmul.mubr.bf16.gmra.mrb[0].mxu0 %v570
        %v703 = vpop.f32.mrb[0].mxu0
        %v704 = vadd.f32 %v445, %v703
        %v705 = vpop.f32.mrb[0].mxu0
        %v706 = vadd.f32 %v449, %v705
        %v707 = vpop.f32.mrb[0].mxu0
        %v708 = vadd.f32 %v445, %v707
        %v709 = vpop.f32.mrb[0].mxu0
        %v710 = vadd.f32 %v449, %v709
        %711 = vmatprep.mubr.bf16.mxu0 0
        %712 = vmatmul.mubr.bf16.gmra.mrb[0].mxu0 %v573
        %v713 = vpop.f32.mrb[0].mxu0
        %v714 = vadd.f32 %v445, %v713
        %v715 = vpop.f32.mrb[0].mxu0
        %v716 = vadd.f32 %v449, %v715
        %v717 = vpop.f32.mrb[0].mxu0
        %v718 = vadd.f32 %v445, %v717
        %v719 = vpop.f32.mrb[0].mxu0
        %v720 = vadd.f32 %v449, %v719
        %721 = vmatprep.mubr.bf16.mxu0 0
        %722 = vmatmul.mubr.bf16.gmra.mrb[0].mxu0 %v576
        %v723 = vpop.f32.mrb[0].mxu0
        %v724 = vadd.f32 %v445, %v723
        %v725 = vpop.f32.mrb[0].mxu0
        %v726 = vadd.f32 %v449, %v725
        %v727 = vpop.f32.mrb[0].mxu0
        %v728 = vadd.f32 %v445, %v727
        %v729 = vpop.f32.mrb[0].mxu0
        %v730 = vadd.f32 %v449, %v729
        %731 = vmatprep.mubr.bf16.mxu0 0
        %732 = vmatmul.mubr.bf16.gmra.mrb[0].mxu0 %v579
        %v733 = vpop.f32.mrb[0].mxu0
        %v734 = vadd.f32 %v445, %v733
        %v735 = vpop.f32.mrb[0].mxu0
        %v736 = vadd.f32 %v449, %v735
        %v737 = vpop.f32.mrb[0].mxu0
        %v738 = vadd.f32 %v445, %v737
        %v739 = vpop.f32.mrb[0].mxu0
        %v740 = vadd.f32 %v449, %v739
        %741 = vmatprep.mubr.bf16.mxu0 0
        %742 = vmatmul.mubr.bf16.gmra.mrb[0].mxu0 %v582
        %v743 = vpop.f32.mrb[0].mxu0
        %v744 = vadd.f32 %v445, %v743
        %v745 = vpop.f32.mrb[0].mxu0
        %v746 = vadd.f32 %v449, %v745
        %v747 = vpop.f32.mrb[0].mxu0
        %v748 = vadd.f32 %v445, %v747
        %v749 = vpop.f32.mrb[0].mxu0
        %v750 = vadd.f32 %v449, %v749
        %751 = vmatprep.mubr.bf16.mxu0 0
        %752 = vmatmul.mubr.bf16.gmra.mrb[0].mxu0 %v585
        %v753 = vpop.f32.mrb[0].mxu0
        %v754 = vadd.f32 %v445, %v753
        %v755 = vpop.f32.mrb[0].mxu0
        %v756 = vadd.f32 %v449, %v755
        %v757 = vpop.f32.mrb[0].mxu0
        %v758 = vadd.f32 %v445, %v757
        %v759 = vpop.f32.mrb[0].mxu0
        %v760 = vadd.f32 %v449, %v759
        %761 = vmatprep.mubr.bf16.mxu0 0
        %762 = vmatmul.mubr.bf16.gmra.mrb[0].mxu0 %v588
        %v763 = vpop.f32.mrb[0].mxu0
        %v764 = vadd.f32 %v445, %v763
        %v765 = vpop.f32.mrb[0].mxu0
        %v766 = vadd.f32 %v449, %v765
        %v767 = vpop.f32.mrb[0].mxu0
        %v768 = vadd.f32 %v445, %v767
        %v769 = vpop.f32.mrb[0].mxu0
        %v770 = vadd.f32 %v449, %v769
        %771 = vmatprep.mubr.bf16.mxu0 0
        %772 = vmatmul.mubr.bf16.gmra.mrb[0].mxu0 %v591
        %v773 = vpop.f32.mrb[0].mxu0
        %v774 = vadd.f32 %v445, %v773
        %v775 = vpop.f32.mrb[0].mxu0
        %v776 = vadd.f32 %v449, %v775
        %v777 = vpop.f32.mrb[0].mxu0
        %v778 = vadd.f32 %v445, %v777
        %v779 = vpop.f32.mrb[0].mxu0
        %v780 = vadd.f32 %v449, %v779
        %781 = vmatprep.mubr.bf16.mxu0 0
        %782 = vmatmul.mubr.bf16.gmra.mrb[0].mxu0 %v594
        %v783 = vpop.f32.mrb[0].mxu0
        %v784 = vadd.f32 %v445, %v783
        %v785 = vpop.f32.mrb[0].mxu0
        %v786 = vadd.f32 %v449, %v785
        %v787 = vpop.f32.mrb[0].mxu0
        %v788 = vadd.f32 %v445, %v787
        %v789 = vpop.f32.mrb[0].mxu0
        %v790 = vadd.f32 %v449, %v789
        %791 = vmatprep.mubr.bf16.mxu0 0
        %792 = vmatmul.mubr.bf16.gmra.mrb[0].mxu0 %v597
        %v793 = vpop.f32.mrb[0].mxu0
        %v794 = vadd.f32 %v445, %v793
        %v795 = vpop.f32.mrb[0].mxu0
        %v796 = vadd.f32 %v449, %v795
        %v797 = vpop.f32.mrb[0].mxu0
        %v798 = vadd.f32 %v445, %v797
        %v799 = vpop.f32.mrb[0].mxu0
        %v800 = vadd.f32 %v449, %v799
        %801 = vdwg.mxu0
        %v802 = vmax.f32 %v644, 0.0
        %v803 = vmax.f32 %v646, 0.0
        %v804 = vmax.f32 %v648, 0.0
        %v805 = vmax.f32 %v650, 0.0
        %v806 = vmax.f32 %v654, 0.0
        %v807 = vmax.f32 %v656, 0.0
        %v808 = vmax.f32 %v658, 0.0
        %v809 = vmax.f32 %v660, 0.0
        %v810 = vmax.f32 %v664, 0.0
        %v811 = vmax.f32 %v666, 0.0
        %v812 = vmax.f32 %v668, 0.0
        %v813 = vmax.f32 %v670, 0.0
        %v814 = vmax.f32 %v674, 0.0
        %v815 = vmax.f32 %v676, 0.0
        %v816 = vmax.f32 %v678, 0.0
        %v817 = vmax.f32 %v680, 0.0
        %v818 = vmax.f32 %v684, 0.0
        %v819 = vmax.f32 %v686, 0.0
        %v820 = vmax.f32 %v688, 0.0
        %v821 = vmax.f32 %v690, 0.0
        %v822 = vmax.f32 %v694, 0.0
        %v823 = vmax.f32 %v696, 0.0
        %v824 = vmax.f32 %v698, 0.0
        %v825 = vmax.f32 %v700, 0.0
        %v826 = vmax.f32 %v704, 0.0
        %v827 = vmax.f32 %v706, 0.0
        %v828 = vmax.f32 %v708, 0.0
        %v829 = vmax.f32 %v710, 0.0
        %v830 = vmax.f32 %v714, 0.0
        %v831 = vmax.f32 %v716, 0.0
        %v832 = vmax.f32 %v718, 0.0
        %v833 = vmax.f32 %v720, 0.0
        %v834 = vmax.f32 %v724, 0.0
        %v835 = vmax.f32 %v726, 0.0
        %v836 = vmax.f32 %v728, 0.0
        %v837 = vmax.f32 %v730, 0.0
        %v838 = vmax.f32 %v734, 0.0
        %v839 = vmax.f32 %v736, 0.0
        %v840 = vmax.f32 %v738, 0.0
        %v841 = vmax.f32 %v740, 0.0
        %v842 = vmax.f32 %v744, 0.0
        %v843 = vmax.f32 %v746, 0.0
        %v844 = vmax.f32 %v748, 0.0
        %v845 = vmax.f32 %v750, 0.0
        %v846 = vmax.f32 %v754, 0.0
        %v847 = vmax.f32 %v756, 0.0
        %v848 = vmax.f32 %v758, 0.0
        %v849 = vmax.f32 %v760, 0.0
        %v850 = vmax.f32 %v764, 0.0
        %v851 = vmax.f32 %v766, 0.0
        %v852 = vmax.f32 %v768, 0.0
        %v853 = vmax.f32 %v770, 0.0
        %v854 = vmax.f32 %v774, 0.0
        %v855 = vmax.f32 %v776, 0.0
        %v856 = vmax.f32 %v778, 0.0
        %v857 = vmax.f32 %v780, 0.0
        %v858 = vmax.f32 %v784, 0.0
        %v859 = vmax.f32 %v786, 0.0
        %v860 = vmax.f32 %v788, 0.0
        %v861 = vmax.f32 %v790, 0.0
        %v862 = vmax.f32 %v794, 0.0
        %v863 = vmax.f32 %v796, 0.0
        %v864 = vmax.f32 %v798, 0.0
        %v865 = vmax.f32 %v800, 0.0
        %v866 = vld [vmem:[#allocation2] sm:$0xf]
        %v867 = vadd.f32 %v802, %v804
        %v868 = vadd.f32 %v867, %v806
        %v869 = vadd.f32 %v868, %v808
        %v870 = vadd.f32 %v869, %v810
        %v871 = vadd.f32 %v870, %v812
        %v872 = vadd.f32 %v871, %v814
        %v873 = vadd.f32 %v872, %v816
        %v874 = vadd.f32 %v873, %v818
        %v875 = vadd.f32 %v874, %v820
        %v876 = vadd.f32 %v875, %v822
        %v877 = vadd.f32 %v876, %v824
        %v878 = vadd.f32 %v877, %v826
        %v879 = vadd.f32 %v878, %v828
        %v880 = vadd.f32 %v879, %v830
        %v881 = vadd.f32 %v880, %v832
        %v882 = vrot.slane %v881, 4
        %v883 = vadd.f32 %v881, %v882
        %v884 = vrot.slane %v883, 2
        %v885 = vadd.f32 %v883, %v884
        %v886 = vrot.slane %v885, 1
        %v887 = vadd.f32 %v885, %v886
        %v888 = vadd.f32 %v803, %v805
        %v889 = vadd.f32 %v888, %v807
        %v890 = vadd.f32 %v889, %v809
        %v891 = vadd.f32 %v890, %v811
        %v892 = vadd.f32 %v891, %v813
        %v893 = vadd.f32 %v892, %v815
        %v894 = vadd.f32 %v893, %v817
        %v895 = vadd.f32 %v894, %v819
        %v896 = vadd.f32 %v895, %v821
        %v897 = vadd.f32 %v896, %v823
        %v898 = vadd.f32 %v897, %v825
        %v899 = vadd.f32 %v898, %v827
        %v900 = vadd.f32 %v899, %v829
        %v901 = vadd.f32 %v900, %v831
        %v902 = vadd.f32 %v901, %v833
        %v903 = vrot.slane %v902, 4
        %v904 = vadd.f32 %v902, %v903
        %v905 = vrot.slane %v904, 2
        %v906 = vadd.f32 %v904, %v905
        %v907 = vrot.slane %v906, 1
        %v908 = vadd.f32 %v906, %v907
        %v909 = vadd.f32 %v834, %v836
        %v910 = vadd.f32 %v909, %v838
        %v911 = vadd.f32 %v910, %v840
        %v912 = vadd.f32 %v911, %v842
        %v913 = vadd.f32 %v912, %v844
        %v914 = vadd.f32 %v913, %v846
        %v915 = vadd.f32 %v914, %v848
        %v916 = vadd.f32 %v915, %v850
        %v917 = vadd.f32 %v916, %v852
        %v918 = vadd.f32 %v917, %v854
        %v919 = vadd.f32 %v918, %v856
        %v920 = vadd.f32 %v919, %v858
        %v921 = vadd.f32 %v920, %v860
        %v922 = vadd.f32 %v921, %v862
        %v923 = vadd.f32 %v922, %v864
        %v924 = vrot.slane %v923, 4
        %v925 = vadd.f32 %v923, %v924
        %v926 = vrot.slane %v925, 2
        %v927 = vadd.f32 %v925, %v926
        %v928 = vrot.slane %v927, 1
        %v929 = vadd.f32 %v927, %v928
        %v930 = vadd.f32 %v835, %v837
        %v931 = vadd.f32 %v930, %v839
        %v932 = vadd.f32 %v931, %v841
        %v933 = vadd.f32 %v932, %v843
        %v934 = vadd.f32 %v933, %v845
        %v935 = vadd.f32 %v934, %v847
        %v936 = vadd.f32 %v935, %v849
        %v937 = vadd.f32 %v936, %v851
        %v938 = vadd.f32 %v937, %v853
        %v939 = vadd.f32 %v938, %v855
        %v940 = vadd.f32 %v939, %v857
        %v941 = vadd.f32 %v940, %v859
        %v942 = vadd.f32 %v941, %v861
        %v943 = vadd.f32 %v942, %v863
        %v944 = vadd.f32 %v943, %v865
        %v945 = vrot.slane %v944, 4
        %v946 = vadd.f32 %v944, %v945
        %v947 = vrot.slane %v946, 2
        %v948 = vadd.f32 %v946, %v947
        %v949 = vrot.slane %v948, 1
        %v950 = vadd.f32 %v948, %v949
        %v955 = vcombine.low %v887, %v908
        %v957 = vunpack.c.l.s4 1983009808
        %v958 = vunpack.c.0.s8 %v957
        %v959 = vlaneseq
        %v960 = vshrl.u32 %v959, 7
        %v961 = vsub.s32 %v958, %v960
        %v962 = vrot.slane %v955, %v961
        %v963 = vcombine.low %v929, %v950
        %v965 = vunpack.c.l.s4 1983009808
        %v966 = vunpack.c.0.s8 %v965
        %v967 = vlaneseq
        %v968 = vshrl.u32 %v967, 7
        %v969 = vsub.s32 %v966, %v968
        %v970 = vrot.slane %v963, %v969
        %vm971 = vcmask 1044484
        %v972 = vsel %vm971, %v962, %v962
        %vm973 = vcmask 1046534
        %v974 = vsel %vm973, %v962, %v972
        %v975 = vrot.slane %v970, 7
        %vm976 = vcmask 1041409
        %v977 = vsel %vm976, %v975, %v974
        %vm978 = vcmask 1043459
        %v979 = vsel %vm978, %v975, %v977
        %vm980 = vcmask 1045509
        %v981 = vsel %vm980, %v975, %v979
        %vm982 = vcmask 1047559
        %v983 = vsel %vm982, %v975, %v981
        %v985 = vadd.f32 %v866, %v983
        %986 = vst [vmem:[#allocation2] sm:$0xf] %v985
        %p987 = scmp.eq.s32.totalorder %s22, 1
        // Predicated region
        $region78: #{tpu_custom_call.1} parent=68 // pred_check
          %p988 = pneg %p987
        $region79: #{tpu_custom_call.1} parent=68 // pred_check_branch
          %990 = sbr.rel (%p988) target = $region81
        $region80: #{tpu_custom_call.1} parent=68 // pred_region
          %v991 = vld [vmem:[#allocation2] sm:$0xf]
          %v992 = vmul.f32 %v991, 0.00390625
          %993 = vst [vmem:[#allocation4] sm:$0xf] %v992
        $region81: #{tpu_custom_call.1} parent=68 // pred_fallthru
          _
        // Predicated region
        $region82: #{tpu_custom_call.1} parent=68 // pred_check
          %p994 = pneg %p134
        $region83: #{tpu_custom_call.1} parent=68 // pred_check_branch
          %996 = sbr.rel (%p994) target = $region85
        $region84: #{tpu_custom_call.1} parent=68 // pred_region
          %s997 = smul.u32 2, %s21
          %s999 = ssub.s32 64, 64
          %1000 = vsyncadd [#allocation5], %s999
          %s1001 = smul.addr %s20, 2
          %s1002 = sadd.s32 %s997, %s1001
          %s1003 = smul.addr %s1002, 32
          %s1004 = scalar_lea.hbm %s3, %s1003
          %s1006 = sshll.u32 [#allocation4], 4
          %s1007 = int_to_ptr.vmem [resolvable:$true] %s1006
          %1009 = dma.vmem_to_hbm [thread:$0]  %s1007, 64, %s1004, [#allocation5]
        $region85: #{tpu_custom_call.1} parent=68 // pred_fallthru
          _
        // Predicated region
        $region86: #{tpu_custom_call.1} parent=68 // pred_check
          %p1010 = pneg %p134
        $region87: #{tpu_custom_call.1} parent=68 // pred_check_branch
          %1012 = sbr.rel (%p1010) target = $region89
        $region88: #{tpu_custom_call.1} parent=68 // pred_region
          %1013 = dma.done [#allocation5], 64
        $region89: #{tpu_custom_call.1} parent=68 // pred_fallthru
          _
      $region69: #{tpu_custom_call.1} parent=5 // pred_fallthru
        _
      %p1014 = scmp.le.s32.totalorder 2, %s10
      // Predicated region
      $region90: #{tpu_custom_call.1} parent=5 // pred_check
        %p1015 = pneg %p1014
      $region91: #{tpu_custom_call.1} parent=5 // pred_check_branch
        %1017 = sbr.rel (%p1015) target = $region93
      $region92: #{tpu_custom_call.1} parent=5 // pred_region
        %s1018 = ssub.s32 %s10, 2
      $region93: #{tpu_custom_call.1} parent=5 // pred_fallthru
        _
    $region6: #{tpu_custom_call.1} parent=1 // loop_footer
      %s14 = sadd.s32 1, %s10
    $region7: #{tpu_custom_call.1} parent=1 // loop_footer_branch
      %9 = sbr.rel target = $region3
    $region8: #{tpu_custom_call.1} parent=1 // loop_exit
      _
    %1019 = vsyncpa [#allocation5], 1
    %s1020 = scalar_lea.sflag [#allocation5], 1
    %1021 = vsyncpa %s1020, 1

</llo_original>
